<compile_context>
chip_gen: v7x
topology: tpu7x:2x2x1
jax: 0.10.0
libtpu: 0.0.40
codegen_flags: <defaults>
</compile_context>

<pallas_src>
import functools
import math

import jax
import jax.numpy as jnp
from jax import lax
from jax.experimental import pallas as pl
from jax.experimental.pallas import tpu as pltpu


def _round_up(x: int, m: int) -> int:
    return ((x + m - 1) // m) * m


def _vmem_limits():
    """Generation-aware VMEM budgets (review item): derived from the chip's
    physical VMEM capacity instead of fixed 48/24 MiB constants."""
    cap = None
    try:
        info = pltpu.get_tpu_info()
        cap = getattr(info, "vmem_capacity_bytes", None) or getattr(info, "vmem_size_bytes", None)
    except Exception:
        cap = None
    if not cap:
        cap = 64 * 1024 * 1024                                # conservative (v7x per-core)
    limit = min(int(cap * 0.6), 96 * 1024 * 1024)             # scoped VMEM limit for Mosaic
    budget = min(int(cap * 0.25), 48 * 1024 * 1024)           # pipelined tiles + resident weights
    return limit, budget


_VMEM_LIMIT_BYTES, _TILE_VMEM_BUDGET = _vmem_limits()


def _compiler_params():
    return pltpu.CompilerParams(
        dimension_semantics=("parallel",),
        vmem_limit_bytes=_VMEM_LIMIT_BYTES,
    )


def _tile_rows(rows, per_row_bytes, resident_bytes, row_align=8, max_rows=1024):
    """Largest row tile that keeps (resident weights + double-buffered tiles)
    under the tile budget.  Resident (constant-index) blocks are charged 2x
    because the pipeline double-buffers them (review item)."""
    avail = _TILE_VMEM_BUDGET - resident_bytes
    if avail >= per_row_bytes * row_align:
        cap = avail // per_row_bytes
    else:
        cap = row_align
    cap = min(cap, max_rows)
    cap = max((cap // row_align) * row_align, row_align)
    return min(cap, _round_up(rows, row_align))


# ---------------------------------------------------------------------------
# NormLayer kernel
# ---------------------------------------------------------------------------
def _norm_kernel(x_ref, alpha_ref, bias_ref, o_ref, *, eps: float):
    # x_ref: (tile_rows, d_model) VMEM tile; normalize over the last axis.
    x = x_ref[...].astype(jnp.float32)
    d = x.shape[-1]
    mean = jnp.mean(x, axis=-1, keepdims=True)
    xc = x - mean
    # torch.Tensor.std: unbiased (ddof=1); eps added to the std (not variance).
    # NOTE: d == 1 gives inf/NaN exactly as torch would.
    var = jnp.sum(xc * xc, axis=-1, keepdims=True) / jnp.float32(d - 1)
    std = jnp.sqrt(var)
    # Exact reciprocal (strict parity with the reference), still only on the
    # narrow (tile_rows, 1) column; the wide work stays a broadcast multiply.
    inv = pl.reciprocal(std + jnp.float32(eps), approx=False)
    alpha = alpha_ref[...].astype(jnp.float32)   # (1, d_model), resident block
    bias = bias_ref[...].astype(jnp.float32)     # (1, d_model), resident block
    o_ref[...] = (alpha * (xc * inv) + bias).astype(o_ref.dtype)


def norm_layer(x, alpha, bias, eps=1e-6):
    """Pallas TPU implementation of NormLayer.forward (normalize over dim=-1)."""
    orig_shape = x.shape
    d_model = orig_shape[-1]
    rows = 1
    for s in orig_shape[:-1]:
        rows *= s
    x2 = x.reshape(rows, d_model)

    resident = 2 * (2 * d_model) * 4                # alpha + bias, double-buffered
    per_row = d_model * 4 * 4                       # in + out tiles, double-buffered, f32
    tile_rows = _tile_rows(rows, per_row, resident)

    padded_rows = _round_up(rows, tile_rows)
    if padded_rows != rows:
        x2 = jnp.pad(x2, ((0, padded_rows - rows), (0, 0)))

    out = pl.pallas_call(
        functools.partial(_norm_kernel, eps=float(eps)),
        out_shape=jax.ShapeDtypeStruct((padded_rows, d_model), x.dtype),
        grid=(padded_rows // tile_rows,),
        in_specs=[
            pl.BlockSpec((tile_rows, d_model), lambda i: (i, 0)),
            pl.BlockSpec((1, d_model), lambda i: (0, 0)),
            pl.BlockSpec((1, d_model), lambda i: (0, 0)),
        ],
        out_specs=pl.BlockSpec((tile_rows, d_model), lambda i: (i, 0)),
        compiler_params=_compiler_params(),
    )(x2, alpha.reshape(1, d_model), bias.reshape(1, d_model))

    return out[:rows].reshape(orig_shape)


# ---------------------------------------------------------------------------
# Linear kernel (PyTorch (out, in) weight layout, optional ReLU / residual)
# ---------------------------------------------------------------------------
def _linear_kernel(x_ref, w_ref, b_ref, *rest, apply_relu: bool, has_residual: bool):
    if has_residual:
        r_ref, o_ref = rest
    else:
        (o_ref,) = rest
    x = x_ref[...].astype(jnp.float32)
    w = w_ref[...].astype(jnp.float32)               # (d_out, d_in) — PyTorch layout
    # y = x @ W^T without any host-side transpose: contract dim 1 of both.
    y = lax.dot_general(x, w, (((1,), (1,)), ((), ())),
                        preferred_element_type=jnp.float32)
    y = y + b_ref[...].astype(jnp.float32)
    if apply_relu:
        y = jnp.maximum(y, jnp.float32(0.0))
    if has_residual:
        y = y + r_ref[...].astype(jnp.float32)
    o_ref[...] = y.astype(o_ref.dtype)


def linear(x, weight, bias, relu=False, residual=None):
    """nn.Linear: y = x @ W^T + b (weight stays (out, in)); optional fused ReLU
    and fused residual add (review items: no weight.T, fused residual)."""
    orig_shape = x.shape
    d_in = orig_shape[-1]
    d_out = weight.shape[0]
    rows = 1
    for s in orig_shape[:-1]:
        rows *= s
    x2 = x.reshape(rows, d_in)
    b2 = bias.reshape(1, d_out)

    has_res = residual is not None
    resident = 2 * (d_in * d_out + d_out) * 4       # weight + bias, double-buffered
    per_row = (d_in + d_out + (d_out if has_res else 0)) * 4 * 2
    tile_rows = _tile_rows(rows, per_row, resident)

    padded_rows = _round_up(rows, tile_rows)
    if padded_rows != rows:
        x2 = jnp.pad(x2, ((0, padded_rows - rows), (0, 0)))

    operands = [x2, weight, b2]
    in_specs = [
        pl.BlockSpec((tile_rows, d_in), lambda i: (i, 0)),
        pl.BlockSpec((d_out, d_in), lambda i: (0, 0)),
        pl.BlockSpec((1, d_out), lambda i: (0, 0)),
    ]
    if has_res:
        r2 = residual.reshape(rows, d_out)
        if padded_rows != rows:
            r2 = jnp.pad(r2, ((0, padded_rows - rows), (0, 0)))
        operands.append(r2)
        in_specs.append(pl.BlockSpec((tile_rows, d_out), lambda i: (i, 0)))

    out = pl.pallas_call(
        functools.partial(_linear_kernel, apply_relu=relu, has_residual=has_res),
        out_shape=jax.ShapeDtypeStruct((padded_rows, d_out), x.dtype),
        grid=(padded_rows // tile_rows,),
        in_specs=in_specs,
        out_specs=pl.BlockSpec((tile_rows, d_out), lambda i: (i, 0)),
        compiler_params=_compiler_params(),
    )(*operands)

    return out[:rows].reshape(*orig_shape[:-1], d_out)


# ---------------------------------------------------------------------------
# Fused FeedForward kernel: relu(x W1^T + b1) W2^T + b2 + residual
# (the (rows, d_ff) hidden never leaves VMEM — review item)
# ---------------------------------------------------------------------------
def _ffn_kernel(x_ref, w1_ref, b1_ref, w2_ref, b2_ref, r_ref, o_ref):
    x = x_ref[...].astype(jnp.float32)
    h = lax.dot_general(x, w1_ref[...].astype(jnp.float32), (((1,), (1,)), ((), ())),
                        preferred_element_type=jnp.float32)
    h = jnp.maximum(h + b1_ref[...].astype(jnp.float32), jnp.float32(0.0))
    # TODO(synk): dropout after ReLU is treated as identity (inference mode).
    y = lax.dot_general(h, w2_ref[...].astype(jnp.float32), (((1,), (1,)), ((), ())),
                        preferred_element_type=jnp.float32)
    y = y + b2_ref[...].astype(jnp.float32) + r_ref[...].astype(jnp.float32)
    o_ref[...] = y.astype(o_ref.dtype)


def feed_forward(p, x, residual):
    orig_shape = x.shape
    d_model = orig_shape[-1]
    d_ff = p["w1"].shape[0]
    rows = 1
    for s in orig_shape[:-1]:
        rows *= s
    x2 = x.reshape(rows, d_model)
    r2 = residual.reshape(rows, d_model)
    b1 = p["b1"].reshape(1, d_ff)
    b2 = p["b2"].reshape(1, d_model)

    resident = 2 * (2 * d_ff * d_model + d_ff + d_model) * 4   # both weights + biases, 2x-buffered
    per_row = (3 * d_model * 2 + 2 * d_ff) * 4                 # x, res, out tiles + hidden headroom
    tile_rows = _tile_rows(rows, per_row, resident)
    # TODO(synk): for very large d_model/d_ff a d_ff grid axis would bound the
    # resident-weight VMEM; not needed at these sizes.

    padded_rows = _round_up(rows, tile_rows)
    if padded_rows != rows:
        x2 = jnp.pad(x2, ((0, padded_rows - rows), (0, 0)))
        r2 = jnp.pad(r2, ((0, padded_rows - rows), (0, 0)))

    out = pl.pallas_call(
        _ffn_kernel,
        out_shape=jax.ShapeDtypeStruct((padded_rows, d_model), x.dtype),
        grid=(padded_rows // tile_rows,),
        in_specs=[
            pl.BlockSpec((tile_rows, d_model), lambda i: (i, 0)),
            pl.BlockSpec((d_ff, d_model), lambda i: (0, 0)),
            pl.BlockSpec((1, d_ff), lambda i: (0, 0)),
            pl.BlockSpec((d_model, d_ff), lambda i: (0, 0)),
            pl.BlockSpec((1, d_model), lambda i: (0, 0)),
            pl.BlockSpec((tile_rows, d_model), lambda i: (i, 0)),
        ],
        out_specs=pl.BlockSpec((tile_rows, d_model), lambda i: (i, 0)),
        compiler_params=_compiler_params(),
    )(x2, p["w1"], b1, p["w2"], b2, r2)

    return out[:rows].reshape(orig_shape)


# ---------------------------------------------------------------------------
# Attention core kernel — one grid step per batch element, all heads packed.
# q/k/v stay in (seq, d_model) layout (no wrapper head split/merge transposes);
# the mask is read at its original (1 | sq, sk) broadcast shape (no per-head
# duplication); the output store is a lane-dense (sq, d_model) slab.
# ---------------------------------------------------------------------------
def _attn_kernel(q_ref, k_ref, v_ref, m_ref, o_ref, *, heads: int, scale: float):
    sq, d_model = q_ref.shape[1], q_ref.shape[2]
    d_k = d_model // heads
    qf = q_ref[0].astype(jnp.float32)            # (sq, d_model)
    kf = k_ref[0].astype(jnp.float32)            # (sk, d_model)
    vf = v_ref[0].astype(jnp.float32)            # (sk, d_model)
    m = m_ref[0]                                 # (mq, sk) int32; mq in {1, sq}

    outs = []
    for h in range(heads):                       # static unroll: MXU pushes back-to-back
        lo, hi = h * d_k, (h + 1) * d_k
        q_h = qf[:, lo:hi]
        k_h = kf[:, lo:hi]
        v_h = vf[:, lo:hi]
        # scores = q @ k^T / sqrt(d_k)
        s = lax.dot_general(q_h, k_h, (((1,), (1,)), ((), ())),
                            preferred_element_type=jnp.float32) * jnp.float32(scale)
        s = jnp.where(m == 1, jnp.float32(-1e9), s)   # masked_fill(mask == 1, -1e9)
        s = s - jnp.max(s, axis=-1, keepdims=True)
        p = jnp.exp(s)
        denom = jnp.sum(p, axis=-1, keepdims=True)
        # approx EUP reciprocal on the narrow (sq, 1) column (review item).
        p = p * pl.reciprocal(denom, approx=True)
        outs.append(jnp.dot(p, v_h, preferred_element_type=jnp.float32))
    o_ref[0] = jnp.concatenate(outs, axis=-1).astype(o_ref.dtype)


def attention_core(q, k, v, mask3, heads):
    """softmax(q k^T / sqrt(d_k), mask==1 -> -1e9) @ v, all heads per batch step."""
    bs, sq, d_model = q.shape
    sk = k.shape[1]
    mq = mask3.shape[1]
    d_k = d_model // heads
    # TODO(synk): for long sequences a flash-style Sk-tiled online-softmax grid
    # would bound the O(sq*sk) scores in VMEM; full-block is fine at these sizes.
    return pl.pallas_call(
        functools.partial(_attn_kernel, heads=heads, scale=1.0 / math.sqrt(d_k)),
        out_shape=jax.ShapeDtypeStruct((bs, sq, d_model), q.dtype),
        grid=(bs,),
        in_specs=[
            pl.BlockSpec((1, sq, d_model), lambda b: (b, 0, 0)),
            pl.BlockSpec((1, sk, d_model), lambda b: (b, 0, 0)),
            pl.BlockSpec((1, sk, d_model), lambda b: (b, 0, 0)),
            pl.BlockSpec((1, mq, sk), lambda b: (b, 0, 0)),
        ],
        out_specs=pl.BlockSpec((1, sq, d_model), lambda b: (b, 0, 0)),
        compiler_params=_compiler_params(),
    )(q, k, v, mask3)


# ---------------------------------------------------------------------------
# Decoder forward (Pallas kernels + plain-JAX glue)
# ---------------------------------------------------------------------------
def _prep_mask(mask, bs, sk):
    """(bs|1, 1, mq, sk) -> (bs, mq, sk) int32 without per-head duplication."""
    if mask is None:
        return jnp.zeros((bs, 1, sk), jnp.int32)
    m = mask.astype(jnp.int32)
    m = m.reshape(m.shape[0], m.shape[2], m.shape[3])
    if m.shape[0] != bs:
        m = jnp.broadcast_to(m, (bs,) + m.shape[1:])
    return m


def multi_head_attention(p, q_in, kv_in, mask, heads, residual, self_attn):
    bs, sq, d_model = q_in.shape
    sk = kv_in.shape[1]

    if self_attn:
        # Fused QKV projection: x2 is read from HBM once for all three.
        w = jnp.concatenate([p["q_w"], p["k_w"], p["v_w"]], axis=0)
        b = jnp.concatenate([p["q_b"], p["k_b"], p["v_b"]], axis=0)
        qkv = linear(q_in, w, b)                        # (bs, sq, 3*d_model)
        q = qkv[..., :d_model]
        k = qkv[..., d_model:2 * d_model]
        v = qkv[..., 2 * d_model:]
    else:
        q = linear(q_in, p["q_w"], p["q_b"])
        w = jnp.concatenate([p["k_w"], p["v_w"]], axis=0)
        b = jnp.concatenate([p["k_b"], p["v_b"]], axis=0)
        kv = linear(kv_in, w, b)                        # (bs, sk, 2*d_model)
        k = kv[..., :d_model]
        v = kv[..., d_model:]

    m = _prep_mask(mask, bs, sk)
    attn = attention_core(q, k, v, m, heads)            # (bs, sq, d_model)
    # Output projection with the residual add fused into the epilogue.
    return linear(attn, p["o_w"], p["o_b"], residual=residual)


def decoder_layer(p, x, e_outputs, src_mask, trg_mask, heads, eps=1e-6):
    x2 = norm_layer(x, p["norm1_a"], p["norm1_b"], eps)
    x = multi_head_attention(p["attn1"], x2, x2, trg_mask, heads, residual=x, self_attn=True)
    x2 = norm_layer(x, p["norm2_a"], p["norm2_b"], eps)
    x = multi_head_attention(p["attn2"], x2, e_outputs, src_mask, heads, residual=x, self_attn=False)
    x2 = norm_layer(x, p["norm3_a"], p["norm3_b"], eps)
    x = feed_forward(p["ff"], x2, residual=x)
    return x


def decoder_forward(params, trg, e_outputs, src_mask, trg_mask, heads, eps=1e-6):
    # TODO(synk): the embedding lookup is a data-dependent gather; kept in
    # plain JAX rather than a Pallas DMA-gather kernel.
    x = jnp.take(params["embed"], trg, axis=0)
    d_model = x.shape[-1]
    seq_len = x.shape[1]
    x = x * math.sqrt(d_model) + params["pe"][:seq_len][None, :, :]
    for lp in params["layers"]:
        x = decoder_layer(lp, x, e_outputs, src_mask, trg_mask, heads, eps)
    return norm_layer(x, params["normf_a"], params["normf_b"], eps)


# ---------------------------------------------------------------------------
# Parameter construction (deterministic) and positional encoding
# ---------------------------------------------------------------------------
def _positional_encoding(max_seq_len, d_model):
    pos = jnp.arange(max_seq_len, dtype=jnp.float32)[:, None]
    col = jnp.arange(0, d_model, 2, dtype=jnp.float32)
    pe = jnp.zeros((max_seq_len, d_model), jnp.float32)
    pe = pe.at[:, 0::2].set(jnp.sin(pos / jnp.power(10000.0, (2.0 * col) / d_model)))
    pe = pe.at[:, 1::2].set(jnp.cos(pos / jnp.power(10000.0, (2.0 * (col + 1.0)) / d_model)))
    return pe


def _init_linear_params(key, d_in, d_out):
    kw, kb = jax.random.split(key)
    lim = 1.0 / math.sqrt(d_in)
    w = jax.random.uniform(kw, (d_out, d_in), jnp.float32, -lim, lim)
    b = jax.random.uniform(kb, (d_out,), jnp.float32, -lim, lim)
    return w, b


def _init_mha_params(key, d_model):
    ks = jax.random.split(key, 4)
    p = {}
    p["q_w"], p["q_b"] = _init_linear_params(ks[0], d_model, d_model)
    p["k_w"], p["k_b"] = _init_linear_params(ks[1], d_model, d_model)
    p["v_w"], p["v_b"] = _init_linear_params(ks[2], d_model, d_model)
    p["o_w"], p["o_b"] = _init_linear_params(ks[3], d_model, d_model)
    return p


def _init_layer_params(key, d_model, d_ff):
    ks = jax.random.split(key, 4)
    p = {
        "norm1_a": jnp.ones((d_model,), jnp.float32),
        "norm1_b": jnp.zeros((d_model,), jnp.float32),
        "norm2_a": jnp.ones((d_model,), jnp.float32),
        "norm2_b": jnp.zeros((d_model,), jnp.float32),
        "norm3_a": jnp.ones((d_model,), jnp.float32),
        "norm3_b": jnp.zeros((d_model,), jnp.float32),
        "attn1": _init_mha_params(ks[0], d_model),
        "attn2": _init_mha_params(ks[1], d_model),
    }
    w1, b1 = _init_linear_params(ks[2], d_model, d_ff)
    w2, b2 = _init_linear_params(ks[3], d_ff, d_model)
    p["ff"] = {"w1": w1, "b1": b1, "w2": w2, "b2": b2}
    return p


def init_decoder_params(key, vocab_size, d_model, n_layers, d_ff, max_seq_len=100):
    ks = jax.random.split(key, n_layers + 1)
    return {
        "embed": jax.random.normal(ks[0], (vocab_size, d_model), jnp.float32),
        "pe": _positional_encoding(max_seq_len, d_model),
        "layers": [_init_layer_params(ks[i + 1], d_model, d_ff) for i in range(n_layers)],
        "normf_a": jnp.ones((d_model,), jnp.float32),
        "normf_b": jnp.zeros((d_model,), jnp.float32),
    }


# ---------------------------------------------------------------------------
# Pure-JAX reference (mirrors the PyTorch module, dropout = identity)
# ---------------------------------------------------------------------------
def _ref_norm(x, a, b, eps=1e-6):
    mean = jnp.mean(x, axis=-1, keepdims=True)
    std = jnp.std(x, axis=-1, keepdims=True, ddof=1)
    return a * (x - mean) / (std + eps) + b


def _ref_linear(x, w, b):
    return jnp.dot(x, w.T) + b


def _ref_mha(p, q_in, k_in, v_in, mask, heads):
    bs, sq, d_model = q_in.shape
    sk = k_in.shape[1]
    d_k = d_model // heads
    q = _ref_linear(q_in, p["q_w"], p["q_b"]).reshape(bs, sq, heads, d_k).transpose(0, 2, 1, 3)
    k = _ref_linear(k_in, p["k_w"], p["k_b"]).reshape(bs, sk, heads, d_k).transpose(0, 2, 1, 3)
    v = _ref_linear(v_in, p["v_w"], p["v_b"]).reshape(bs, sk, heads, d_k).transpose(0, 2, 1, 3)
    s = jnp.einsum("bhqd,bhkd->bhqk", q, k) / math.sqrt(d_k)
    m = jnp.broadcast_to(mask, s.shape)
    s = jnp.where(m == 1, -1e9, s)
    a = jax.nn.softmax(s, axis=-1)
    o = jnp.einsum("bhqk,bhkd->bhqd", a, v)
    o = o.transpose(0, 2, 1, 3).reshape(bs, sq, d_model)
    return _ref_linear(o, p["o_w"], p["o_b"])


def _ref_ff(p, x):
    return _ref_linear(jax.nn.relu(_ref_linear(x, p["w1"], p["b1"])), p["w2"], p["b2"])


def ref_decoder_forward(params, trg, e_outputs, src_mask, trg_mask, heads, eps=1e-6):
    x = jnp.take(params["embed"], trg, axis=0)
    d_model = x.shape[-1]
    x = x * math.sqrt(d_model) + params["pe"][: x.shape[1]][None, :, :]
    for p in params["layers"]:
        x2 = _ref_norm(x, p["norm1_a"], p["norm1_b"], eps)
        x = x + _ref_mha(p["attn1"], x2, x2, x2, trg_mask, heads)
        x2 = _ref_norm(x, p["norm2_a"], p["norm2_b"], eps)
        x = x + _ref_mha(p["attn2"], x2, e_outputs, e_outputs, src_mask, heads)
        x2 = _ref_norm(x, p["norm3_a"], p["norm3_b"], eps)
        x = x + _ref_ff(p["ff"], x2)
    return _ref_norm(x, params["normf_a"], params["normf_b"], eps)


# ---------------------------------------------------------------------------
if __name__ == "__main__":
    key = jax.random.PRNGKey(0)

    vocab_size = 11
    d_model = 32
    n_layers = 2
    heads = 4
    d_ff = 2048          # FeedForward default in the PyTorch module
    batch = 2
    trg_seq = 8
    src_seq = 10

    keys = jax.random.split(key, 3)
    params = init_decoder_params(keys[0], vocab_size, d_model, n_layers, d_ff)

    trg = jax.random.randint(keys[1], (batch, trg_seq), 0, vocab_size)
    e_outputs = jax.random.normal(keys[2], (batch, src_seq, d_model), dtype=jnp.float32)

    # trg_mask: causal; mask == 1 marks positions to be filled with -1e9.
    causal = (jnp.arange(trg_seq)[None, :] > jnp.arange(trg_seq)[:, None]).astype(jnp.int32)
    trg_mask = jnp.broadcast_to(causal, (batch, 1, trg_seq, trg_seq))
    # src_mask: block the last two source positions of batch element 1.
    src_mask = jnp.zeros((batch, 1, 1, src_seq), jnp.int32)
    src_mask = src_mask.at[1, 0, 0, -2:].set(1)

    out = decoder_forward(params, trg, e_outputs, src_mask, trg_mask, heads)
    out = jax.block_until_ready(out)

    ref = ref_decoder_forward(params, trg, e_outputs, src_mask, trg_mask, heads)

    assert out.shape == (batch, trg_seq, d_model) and out.dtype == jnp.float32
    assert bool(jnp.all(jnp.isfinite(out)))
    # Exact reciprocal in the norm; approx EUP reciprocal only in the softmax
    # denominator => much tighter tolerance than before.
    max_err = float(jnp.max(jnp.abs(out - ref)))
    assert jnp.allclose(out, ref, atol=5e-3, rtol=5e-3), f"max abs err = {max_err}"

    print("KERNEL_OK")
</pallas_src>

<mosaic_0001>
module attributes {stable_mosaic.version = 11 : i64} {
  func.func @_norm_kernel(%arg0: i32, %arg1: memref<16x32xf32, #tpu.memory_space<vmem>>, %arg2: memref<1x32xf32, #tpu.memory_space<vmem>>, %arg3: memref<1x32xf32, #tpu.memory_space<vmem>>, %arg4: memref<16x32xf32, #tpu.memory_space<vmem>>) attributes {dimension_semantics = [#tpu.dimension_semantics<parallel>], iteration_bounds = array<i64: 1>, scalar_prefetch = 0 : i64, scratch_operands = 0 : i64, tpu.core_type = #tpu.core_type<tc>, window_params = [{transform_indices = @transform_0, window_bounds = array<i64: 16, 32>}, {pipeline_mode = #tpu.pipeline_mode<synchronous>, transform_indices = @transform_1, window_bounds = array<i64: 1, 32>}, {pipeline_mode = #tpu.pipeline_mode<synchronous>, transform_indices = @transform_2, window_bounds = array<i64: 1, 32>}, {transform_indices = @transform_3, window_bounds = array<i64: 16, 32>}]} {
    %c0 = arith.constant 0 : index
    %c0_0 = arith.constant 0 : index
    %0 = vector.load %arg1[%c0, %c0_0] : memref<16x32xf32, #tpu.memory_space<vmem>>, vector<16x32xf32>
    %cst = arith.constant dense<0.000000e+00> : vector<16xf32>
    %1 = vector.multi_reduction <add>, %0, %cst [1] : vector<16x32xf32> to vector<16xf32>
    %2 = vector.shape_cast %1 : vector<16xf32> to vector<16x1xf32>
    %cst_1 = arith.constant 3.200000e+01 : f32
    %3 = vector.broadcast %cst_1 : f32 to vector<16x1xf32>
    %4 = arith.divf %2, %3 : vector<16x1xf32>
    %5 = vector.broadcast %4 : vector<16x1xf32> to vector<16x32xf32>
    %6 = arith.subf %0, %5 : vector<16x32xf32>
    %7 = arith.mulf %6, %6 : vector<16x32xf32>
    %cst_2 = arith.constant dense<0.000000e+00> : vector<16xf32>
    %8 = vector.multi_reduction <add>, %7, %cst_2 [1] : vector<16x32xf32> to vector<16xf32>
    %9 = vector.shape_cast %8 : vector<16xf32> to vector<16x1xf32>
    %cst_3 = arith.constant 3.100000e+01 : f32
    %10 = vector.broadcast %cst_3 : f32 to vector<16x1xf32>
    %11 = arith.divf %9, %10 : vector<16x1xf32>
    %12 = math.sqrt %11 : vector<16x1xf32>
    %cst_4 = arith.constant 9.99999997E-7 : f32
    %13 = vector.broadcast %cst_4 : f32 to vector<16x1xf32>
    %14 = arith.addf %12, %13 : vector<16x1xf32>
    %15 = tpu.reciprocal %14 : vector<16x1xf32> -> vector<16x1xf32>
    %c0_5 = arith.constant 0 : index
    %c0_6 = arith.constant 0 : index
    %16 = vector.load %arg2[%c0_5, %c0_6] : memref<1x32xf32, #tpu.memory_space<vmem>>, vector<1x32xf32>
    %c0_7 = arith.constant 0 : index
    %c0_8 = arith.constant 0 : index
    %17 = vector.load %arg3[%c0_7, %c0_8] : memref<1x32xf32, #tpu.memory_space<vmem>>, vector<1x32xf32>
    %18 = vector.broadcast %15 : vector<16x1xf32> to vector<16x32xf32>
    %19 = arith.mulf %6, %18 : vector<16x32xf32>
    %20 = vector.broadcast %16 : vector<1x32xf32> to vector<16x32xf32>
    %21 = arith.mulf %20, %19 : vector<16x32xf32>
    %22 = vector.broadcast %17 : vector<1x32xf32> to vector<16x32xf32>
    %23 = arith.addf %21, %22 : vector<16x32xf32>
    %c0_9 = arith.constant 0 : index
    %c0_10 = arith.constant 0 : index
    %24 = vector.load %arg4[%c0_9, %c0_10] : memref<16x32xf32, #tpu.memory_space<vmem>>, vector<16x32xf32>
    tpu.vector_store %arg4[%c0_9, %c0_10], %23 {strides = array<i32>} : memref<16x32xf32, #tpu.memory_space<vmem>>, vector<16x32xf32>,
    return
  }
  func.func @transform_0(%arg0: i32) -> (i32, i32) {
    %c0_i32 = arith.constant 0 : i32
    %c0_i32_0 = arith.constant 0 : i32
    return %arg0, %c0_i32 : i32, i32
  }
  func.func @transform_1(%arg0: i32) -> (i32, i32) {
    %c0_i32 = arith.constant 0 : i32
    %c0_i32_0 = arith.constant 0 : i32
    %c0_i32_1 = arith.constant 0 : i32
    return %c0_i32, %c0_i32_0 : i32, i32
  }
  func.func @transform_2(%arg0: i32) -> (i32, i32) {
    %c0_i32 = arith.constant 0 : i32
    %c0_i32_0 = arith.constant 0 : i32
    %c0_i32_1 = arith.constant 0 : i32
    return %c0_i32, %c0_i32_0 : i32, i32
  }
  func.func @transform_3(%arg0: i32) -> (i32, i32) {
    %c0_i32 = arith.constant 0 : i32
    %c0_i32_0 = arith.constant 0 : i32
    return %arg0, %c0_i32 : i32, i32
  }
}

</mosaic_0001>

<llo_original>
// kernel: tpu_custom_call.1
$region0: #{tpu_custom_call.1}
  #allocation0 [shape = 'u32[]', space=smem, size = 0x4, offset = 0x4, fixed_abs, tag = 'smem constant byte address 0x4 - core index']
  #allocation1 [shape = 'u32[144,128]{1,0:T(1,128)}', space=vmem, size = 0x12000, scoped, tag = 'internal scratch']
  %s0 = inlined_call_operand.hbm [shape: f32[16,32], index: 0, kind: input, shape index: {}]
  %s1 = inlined_call_operand.vmem [shape: f32[1,32], index: 1, kind: input, shape index: {}]
  %s2 = inlined_call_operand.vmem [shape: f32[1,32], index: 2, kind: input, shape index: {}]
  %s3 = inlined_call_operand.hbm [shape: f32[16,32], index: 3, kind: output, shape index: {}]
  %s4 = sld [smem:[#allocation0]]
  $region26: #{tpu_custom_call.1} parent=0
    _
  %s6 = ssub.s32 1, %s4
  %s7 = scalar_select 0, %s6, %s4
  $region1: #{tpu_custom_call.1} parent=0
    #allocation2 [shape = 'u8[8192]{0}', space=vmem, size = 0x2000, scoped, tag = 'input window, operand 0, single buffered']
    #allocation3 [shape = 's32[1]{0}', space=sflag, size = 0x4, scoped, tag = 'scoped memory for tpu_custom_call.1']
    #allocation4 [shape = 's32[1]{0}', space=sflag, size = 0x4, scoped, tag = 'scoped memory for tpu_custom_call.1']
    #allocation5 [shape = 'u8[8192]{0}', space=vmem, size = 0x2000, scoped, tag = 'output window, operand 0, single buffered']
    %8 = vsyncpa [#allocation3], 0
    %9 = vsyncpa [#allocation4], 0
    // Predicated region
    $region2: #{tpu_custom_call.1} parent=1 // pred_check
      _
    $region3: #{tpu_custom_call.1} parent=1 // pred_check_branch
      %11 = sbr.rel (0) target = $region5
    $region4: #{tpu_custom_call.1} parent=1 // pred_region
      %s13 = ssub.s32 256, 256
      %14 = vsyncadd [#allocation3], %s13
      %s15 = sshll.u32 [#allocation2], 4
      %s16 = int_to_ptr.vmem [resolvable:$true] %s15
      %21 = dma.hbm_to_vmem [thread:$0]  %s0, 256, %s16, [#allocation3], 128, 128, 8
    $region5: #{tpu_custom_call.1} parent=1 // pred_fallthru
      _
    // Predicated region
    $region6: #{tpu_custom_call.1} parent=1 // pred_check
      _
    $region7: #{tpu_custom_call.1} parent=1 // pred_check_branch
      %23 = sbr.rel (0) target = $region9
    $region8: #{tpu_custom_call.1} parent=1 // pred_region
      _
    $region9: #{tpu_custom_call.1} parent=1 // pred_fallthru
      _
    // Predicated region
    $region10: #{tpu_custom_call.1} parent=1 // pred_check
      _
    $region11: #{tpu_custom_call.1} parent=1 // pred_check_branch
      %25 = sbr.rel (0) target = $region13
    $region12: #{tpu_custom_call.1} parent=1 // pred_region
      _
    $region13: #{tpu_custom_call.1} parent=1 // pred_fallthru
      _
    // Predicated region
    $region14: #{tpu_custom_call.1} parent=1 // pred_check
      _
    $region15: #{tpu_custom_call.1} parent=1 // pred_check_branch
      %27 = sbr.rel (0) target = $region17
    $region16: #{tpu_custom_call.1} parent=1 // pred_region
      %28 = dma.done [#allocation3], 256
    $region17: #{tpu_custom_call.1} parent=1 // pred_fallthru
      _
    %v29 = vld [vmem:[#allocation2] sm:$0xff]
    %v30 = vld [vmem:[#allocation2 + $0x8] sm:$0xff]
    %vm31 = vcmask 261120
    %v32 = vsel %vm31, %v29, 0.0
    %33 = vadd.xlane.f32.xlu0 %v32
    %v34 = vpop.xlane.xlu0 %33
    %v35 = vsel %vm31, %v30, 0.0
    %36 = vadd.xlane.f32.xlu0 %v35
    %v37 = vpop.xlane.xlu0 %36
    %v38 = vrcp.pop 32.0
    %v39 = vmul.f32 %v34, %v38
    %v40 = vmul.f32 %v37, %v38
    %v41 = vsub.f32 %v29, %v39
    %v42 = vsub.f32 %v30, %v40
    %v43 = vmul.f32 %v41, %v41
    %v44 = vmul.f32 %v42, %v42
    %v45 = vsel %vm31, %v43, 0.0
    %46 = vadd.xlane.f32.xlu0 %v45
    %v47 = vpop.xlane.xlu0 %46
    %v48 = vsel %vm31, %v44, 0.0
    %49 = vadd.xlane.f32.xlu0 %v48
    %v50 = vpop.xlane.xlu0 %49
    %v51 = vrcp.pop 31.0
    %v52 = vmul.f32 %v47, %v51
    %v53 = vmul.f32 %v50, %v51
    %v54 = vrsqrt.pop %v52
    %v55 = vmul.f32 %v52, %v54
    %vm56 = vcmp.eq.f32.partialorder %v52, inf
    %v57 = vsel %vm56, %v52, %v55
    %vm58 = vcmp.eq.f32.partialorder %v52, 0.0
    %v59 = vand.u32 %v52, 2147483648
    %v60 = vsel %vm58, %v59, %v57
    %v61 = vrsqrt.pop %v53
    %v62 = vmul.f32 %v53, %v61
    %vm63 = vcmp.eq.f32.partialorder %v53, inf
    %v64 = vsel %vm63, %v53, %v62
    %vm65 = vcmp.eq.f32.partialorder %v53, 0.0
    %v66 = vand.u32 %v53, 2147483648
    %v67 = vsel %vm65, %v66, %v64
    %v68 = vadd.f32 %v60, 1e-06
    %v69 = vadd.f32 %v67, 1e-06
    %v70 = vrcp.pop %v68
    %v71 = vrcp.pop %v69
    %v72 = vld [vmem:[%s1] sm:$0x1]
    %v73 = vld [vmem:[%s2] sm:$0x1]
    %v74 = vmul.f32 %v41, %v70
    %v75 = vmul.f32 %v42, %v71
    %v77 = vlaneseq
    %v78 = vshrl.u32 %v77, 7
    %v79 = vsub.s32 0, %v78
    %v80 = vrot.slane %v72, %v79
    %v82 = vmul.f32 %v80, %v74
    %v83 = vmul.f32 %v80, %v75
    %v85 = vlaneseq
    %v86 = vshrl.u32 %v85, 7
    %v87 = vsub.s32 0, %v86
    %v88 = vrot.slane %v73, %v87
    %v90 = vadd.f32 %v82, %v88
    %v91 = vadd.f32 %v83, %v88
    %92 = vst.msk [vmem:[#allocation5] sm:$0xff] %vm31, %v90
    %93 = vst.msk [vmem:[#allocation5 + $0x8] sm:$0xff] %vm31, %v91
    // Predicated region
    $region18: #{tpu_custom_call.1} parent=1 // pred_check
      _
    $region19: #{tpu_custom_call.1} parent=1 // pred_check_branch
      %95 = sbr.rel (0) target = $region21
    $region20: #{tpu_custom_call.1} parent=1 // pred_region
      %s97 = ssub.s32 256, 256
      %98 = vsyncadd [#allocation4], %s97
      %s99 = sshll.u32 [#allocation5], 4
      %s100 = int_to_ptr.vmem [resolvable:$true] %s99
      %105 = dma.vmem_to_hbm [thread:$0]  %s100, 256, %s3, [#allocation4], 128, 128, 8
    $region21: #{tpu_custom_call.1} parent=1 // pred_fallthru
      _
    // Predicated region
    $region22: #{tpu_custom_call.1} parent=1 // pred_check
      _
    $region23: #{tpu_custom_call.1} parent=1 // pred_check_branch
      %107 = sbr.rel (0) target = $region25
    $region24: #{tpu_custom_call.1} parent=1 // pred_region
      %108 = dma.done [#allocation4], 256
    $region25: #{tpu_custom_call.1} parent=1 // pred_fallthru
      _
    %109 = vsyncpa [#allocation3], 1
    %110 = vsyncpa [#allocation4], 1

</llo_original>
